<compile_context>
chip_gen: v6e
topology: v6e:2x2x1
jax: 0.10.0
libtpu: 0.0.40
codegen_flags: <defaults>
</compile_context>

<pallas_src>
import jax
import jax.numpy as jnp
from jax import lax
from jax.experimental import pallas as pl
from jax.experimental.pallas import tpu as pltpu


def readout_kernel(x_ref, w1_ref, b1w2_ref, b2_ref, o_ref):
    # x_ref   : [TB, bert_hs]   CLS rows of this batch tile (f32, gathered by BlockSpec)
    # w1_ref  : [bert_hs, H]    fc1 weight (pre-transposed), bf16, VMEM-resident
    # b1w2_ref: [2, H]          row 0 = fc1 bias, row 1 = fc2 weight (f32, resident)
    # b2_ref  : [1, 1]          fc2 bias scalar in SMEM
    # o_ref   : [1, TB]         lane-dense output row for this batch tile
    xb = x_ref[...].astype(w1_ref.dtype)                               # bf16 MXU path
    h = jnp.dot(xb, w1_ref[...], preferred_element_type=jnp.float32)  # (TB, H), f32 acc
    h = jnp.maximum(h + b1w2_ref[0:1, :], 0.0)                        # bias + ReLU (VPU)
    # fc2 (out_features = 1): contract H against the fc2 weight row with the
    # transposed-RHS matmul pattern so the result is already a lane-dense (1, TB)
    # row (no (TB, 1) masked-store epilogue).  Extra MXU work is ~8/bert_hs of fc1's.
    row = lax.dot_general(
        b1w2_ref[1:2, :], h,
        dimension_numbers=(((1,), (1,)), ((), ())),
        preferred_element_type=jnp.float32)                           # (1, TB)
    o_ref[...] = (row + b2_ref[0, 0]).astype(o_ref.dtype)


def _choose_batch_tile(batch, max_tile=1024):
    """Pick a lane-dense batch tile (multiple of 128) and the padded batch size.

    Prefers large tiles (the kernel is x-DMA-bound, so big tiles amortize per-step
    overhead) while keeping >= 2 grid steps whenever the batch spans >= 2 lane
    blocks, so v7x can split the batch across its 2 TensorCores.
    """
    max_tile = max(128, (max_tile // 128) * 128)
    blocks = pl.cdiv(batch, 128)                      # batch measured in 128-row units
    min_tiles = 2 if blocks >= 2 else 1               # >= 2 grid steps when possible
    num_tiles = max(pl.cdiv(batch, max_tile), min_tiles)
    tb = min(max_tile, 128 * max(1, blocks // num_tiles))
    grid = pl.cdiv(batch, tb)
    return tb, grid * tb                              # (tile, padded batch)


def _vmem_limit_bytes(tb, bert_hs, hidden, w1_itemsize):
    # Pallas double-buffers every operand by default (even constant index_maps),
    # so count 2 buffers each; the (1, tb) output tile pads to 8 sublanes.
    est = (2 * tb * bert_hs * 4                        # x tile (f32)
           + 2 * bert_hs * hidden * w1_itemsize        # w1 (resident, still 2 buffers)
           + 2 * 2 * max(hidden, 128) * 4              # packed b1/w2 rows
           + 2 * 8 * tb * 4)                           # lane-dense output row tile
    try:
        cap = int(getattr(pltpu.get_tpu_info(), "vmem_capacity_bytes", 64 << 20))
    except Exception:
        cap = 64 << 20                                 # conservative: v7x per-core VMEM
    cap = (3 * cap) // 4                               # headroom for Mosaic scratch
    return int(min(max(2 * est + (4 << 20), 16 << 20), cap))


def readout_forward(x, w1, b1, w2, b2, *, batch_tile=1024):
    """Readout forward: fc2(relu(fc1(x[:, 0]))).  Returns [batch, 1] float32.

    x : [batch, seq, bert_hs] float32 (only the CLS token is read)
    Weight layout (relative to torch):
      w1 = fc1.weight.T -> [bert_hs, hidden]  (ideally stored bf16; cast is a fallback)
      b1 = fc1.bias     -> [hidden] or [1, hidden]
      w2 = fc2.weight   -> [1, hidden]
      b2 = fc2.bias     -> scalar / [1] / [1, 1]
    """
    batch, seq, bert_hs = x.shape
    hidden = w1.shape[1]

    if w1.dtype != jnp.bfloat16:
        # Prefer storing w1 in bf16 at the caller (init_params does) so this per-call
        # f32->bf16 HBM round trip is never paid on the hot path.
        w1 = w1.astype(jnp.bfloat16)
    b1w2 = jnp.concatenate(
        [jnp.reshape(b1, (1, hidden)).astype(jnp.float32),
         jnp.reshape(w2, (1, hidden)).astype(jnp.float32)], axis=0)   # [2, hidden]
    b2 = jnp.reshape(b2, (1, 1)).astype(jnp.float32)

    tb, batch_pad = _choose_batch_tile(batch, batch_tile)
    grid = (batch_pad // tb,)

    if batch_pad == batch and seq > 1 and bert_hs % 128 == 0:
        # Fused CLS gather: view x as [batch, seq*bert_hs] (free for a contiguous array)
        # and DMA only the first bert_hs lanes of each row (= x[:, 0, :]).
        x_in = x.reshape(batch, seq * bert_hs)
    else:
        # Padded / lane-unaligned fallback: wrapper-side CLS slice (+ zero pad) so the
        # kernel always sees a [batch_pad, bert_hs] array whose last dim is a full row.
        x_in = x[:, 0, :]
        if batch_pad != batch:
            x_in = jnp.pad(x_in, ((0, batch_pad - batch), (0, 0)))
    x_spec = pl.BlockSpec((tb, bert_hs), lambda i: (i, 0))

    out2d = pl.pallas_call(
        readout_kernel,
        out_shape=jax.ShapeDtypeStruct((1, batch_pad), jnp.float32),
        grid=grid,
        in_specs=[
            x_spec,                                                   # batch-tiled CLS rows
            pl.BlockSpec((bert_hs, hidden), lambda i: (0, 0)),        # w1, VMEM-resident
            pl.BlockSpec((2, hidden), lambda i: (0, 0)),              # packed b1/w2, resident
            pl.BlockSpec(memory_space=pltpu.MemorySpace.SMEM),        # b2 scalar
        ],
        out_specs=pl.BlockSpec((1, tb), lambda i: (0, i)),            # lane-dense output row
        compiler_params=pltpu.CompilerParams(
            dimension_semantics=("parallel",),       # batch tiles shard across v7x's 2 TCs
            vmem_limit_bytes=_vmem_limit_bytes(tb, bert_hs, hidden, w1.dtype.itemsize),
        ),
    )(x_in, w1, b1w2, b2)

    return out2d[0, :batch].reshape(batch, 1)


def init_params(key, bert_hs, hidden_size):
    """Deterministic synthetic parameters (torch Linear shapes; fc1 stored transposed
    and in bf16 so the resident-weight DMA is half-width and no per-call cast is needed)."""
    k1, k2, k3, k4 = jax.random.split(key, 4)
    w1 = (jax.random.normal(k1, (bert_hs, hidden_size), jnp.float32) * 0.05
          ).astype(jnp.bfloat16)                                          # fc1.weight.T
    b1 = jax.random.normal(k2, (1, hidden_size), jnp.float32) * 0.1       # fc1.bias
    w2 = jax.random.normal(k3, (1, hidden_size), jnp.float32) * 0.05      # fc2.weight
    b2 = jax.random.normal(k4, (1, 1), jnp.float32) * 0.1                 # fc2.bias
    return w1, b1, w2, b2


if __name__ == "__main__":
    key = jax.random.PRNGKey(0)
    seq, bert_hs, hidden_size = 8, 128, 128      # small, lane-aligned toy shapes

    kx1, kx2, kp = jax.random.split(key, 3)
    w1, b1, w2, b2 = init_params(kp, bert_hs, hidden_size)
    w1_f32 = w1.astype(jnp.float32)

    def matched_ref(x):
        # Mirrors the kernel numerics: bf16-rounded x / w1 into an f32-accumulated fc1.
        h = jnp.maximum(
            x[:, 0].astype(jnp.bfloat16).astype(jnp.float32) @ w1_f32 + b1, 0.0)
        return h @ w2.T + b2

    fwd = jax.jit(readout_forward)

    # Path 1: batch is a multiple of the 128-lane tile -> fused CLS gather, 2-step grid.
    x1 = jax.random.normal(kx1, (256, seq, bert_hs), jnp.float32)
    out1 = jax.block_until_ready(fwd(x1, w1, b1, w2, b2))
    assert out1.shape == (256, 1)
    assert jnp.allclose(out1, matched_ref(x1), atol=5e-3, rtol=5e-3), "mismatch (fused path)"

    # Path 2: small / non-divisible batch -> wrapper CLS slice + zero padding.
    x2 = jax.random.normal(kx2, (32, seq, bert_hs), jnp.float32)
    out2 = jax.block_until_ready(fwd(x2, w1, b1, w2, b2))
    assert out2.shape == (32, 1)
    assert jnp.allclose(out2, matched_ref(x2), atol=5e-3, rtol=5e-3), "mismatch (padded path)"

    # Full-precision semantic reference of the PyTorch module (looser: fc1 runs in bf16).
    ref_f32 = jnp.maximum(x1[:, 0] @ w1_f32 + b1, 0.0) @ w2.T + b2
    assert jnp.allclose(out1, ref_f32, atol=2e-2, rtol=2e-2), "mismatch vs f32 reference"

    print("KERNEL_OK")
</pallas_src>

<mosaic_0001>
module attributes {stable_mosaic.version = 11 : i64} {
  func.func @readout_kernel(%arg0: i32, %arg1: memref<128x128xf32, #tpu.memory_space<vmem>>, %arg2: memref<128x128xbf16, #tpu.memory_space<vmem>>, %arg3: memref<2x128xf32, #tpu.memory_space<vmem>>, %arg4: memref<1x1xf32, #tpu.memory_space<smem>>, %arg5: memref<1x128xf32, #tpu.memory_space<vmem>>) attributes {dimension_semantics = [#tpu.dimension_semantics<parallel>], iteration_bounds = array<i64: 2>, scalar_prefetch = 0 : i64, scratch_operands = 0 : i64, tpu.core_type = #tpu.core_type<tc>, window_params = [{transform_indices = @transform_0, window_bounds = array<i64: 128, 128>}, {pipeline_mode = #tpu.pipeline_mode<synchronous>, transform_indices = @transform_1, window_bounds = array<i64: 128, 128>}, {pipeline_mode = #tpu.pipeline_mode<synchronous>, transform_indices = @transform_2, window_bounds = array<i64: 2, 128>}, {transform_indices = @transform_3, window_bounds = array<i64: 1, 1>}, {transform_indices = @transform_4, window_bounds = array<i64: 1, 128>}]} {
    %c0 = arith.constant 0 : index
    %c0_0 = arith.constant 0 : index
    %0 = vector.load %arg1[%c0, %c0_0] : memref<128x128xf32, #tpu.memory_space<vmem>>, vector<128x128xf32>
    %1 = arith.truncf %0 : vector<128x128xf32> to vector<128x128xbf16>
    %c0_1 = arith.constant 0 : index
    %c0_2 = arith.constant 0 : index
    %2 = vector.load %arg2[%c0_1, %c0_2] : memref<128x128xbf16, #tpu.memory_space<vmem>>, vector<128x128xbf16>
    %cst = arith.constant dense<0.000000e+00> : vector<128x128xf32>
    %3 = tpu.matmul %1, %2, %cst {dimension_numbers = #tpu.dot_dimension_numbers<[1], [0], [0], [1], [0, 0, 1, 1], [], []>} : vector<128x128xbf16>, vector<128x128xbf16>, vector<128x128xf32> -> vector<128x128xf32>
    %c0_3 = arith.constant 0 : index
    %c0_4 = arith.constant 0 : index
    %4 = vector.load %arg3[%c0_3, %c0_4] : memref<2x128xf32, #tpu.memory_space<vmem>>, vector<1x128xf32>
    %5 = vector.broadcast %4 : vector<1x128xf32> to vector<128x128xf32>
    %6 = arith.addf %3, %5 : vector<128x128xf32>
    %cst_5 = arith.constant 0.000000e+00 : f32
    %7 = vector.broadcast %cst_5 : f32 to vector<128x128xf32>
    %8 = arith.maximumf %6, %7 : vector<128x128xf32>
    %c1 = arith.constant 1 : index
    %c0_6 = arith.constant 0 : index
    %9 = vector.load %arg3[%c1, %c0_6] : memref<2x128xf32, #tpu.memory_space<vmem>>, vector<1x128xf32>
    %cst_7 = arith.constant dense<0.000000e+00> : vector<1x128xf32>
    %10 = tpu.matmul %9, %8, %cst_7 {dimension_numbers = #tpu.dot_dimension_numbers<[1], [1], [0], [0], [0, 0, 1, 0], [], []>} : vector<1x128xf32>, vector<128x128xf32>, vector<1x128xf32> -> vector<1x128xf32>
    %c0_8 = arith.constant 0 : index
    %c0_9 = arith.constant 0 : index
    %11 = memref.load %arg4[%c0_8, %c0_9] : memref<1x1xf32, #tpu.memory_space<smem>>
    %12 = vector.broadcast %11 : f32 to vector<1x128xf32>
    %13 = arith.addf %10, %12 : vector<1x128xf32>
    %c0_10 = arith.constant 0 : index
    %c0_11 = arith.constant 0 : index
    %14 = vector.load %arg5[%c0_10, %c0_11] : memref<1x128xf32, #tpu.memory_space<vmem>>, vector<1x128xf32>
    tpu.vector_store %arg5[%c0_10, %c0_11], %13 {strides = array<i32>} : memref<1x128xf32, #tpu.memory_space<vmem>>, vector<1x128xf32>,
    return
  }
  func.func @transform_0(%arg0: i32) -> (i32, i32) {
    %c0_i32 = arith.constant 0 : i32
    %c0_i32_0 = arith.constant 0 : i32
    return %arg0, %c0_i32 : i32, i32
  }
  func.func @transform_1(%arg0: i32) -> (i32, i32) {
    %c0_i32 = arith.constant 0 : i32
    %c0_i32_0 = arith.constant 0 : i32
    %c0_i32_1 = arith.constant 0 : i32
    return %c0_i32, %c0_i32_0 : i32, i32
  }
  func.func @transform_2(%arg0: i32) -> (i32, i32) {
    %c0_i32 = arith.constant 0 : i32
    %c0_i32_0 = arith.constant 0 : i32
    %c0_i32_1 = arith.constant 0 : i32
    return %c0_i32, %c0_i32_0 : i32, i32
  }
  func.func @transform_3(%arg0: i32) -> (i32, i32) {
    %c0_i32 = arith.constant 0 : i32
    %c0_i32_0 = arith.constant 0 : i32
    %c0_i32_1 = arith.constant 0 : i32
    return %c0_i32, %c0_i32_0 : i32, i32
  }
  func.func @transform_4(%arg0: i32) -> (i32, i32) {
    %c0_i32 = arith.constant 0 : i32
    %c0_i32_0 = arith.constant 0 : i32
    return %c0_i32, %arg0 : i32, i32
  }
}

</mosaic_0001>

<llo_original>
// kernel: readout_forward.1
$region0: #{readout_forward.1}
  #allocation0 [shape = 'u32[]', space=smem, size = 0x4, offset = 0x4, fixed_abs, tag = 'smem constant byte address 0x4 - core index']
  #allocation1 [shape = 'u32[144,128]{1,0:T(1,128)}', space=vmem, size = 0x12000, scoped, tag = 'internal scratch']
  #allocation2 [shape = 'f32[1,1]{1,0:T(1,128)S(6)}', space=smem, size = 0x200, scoped, tag = 'scoped memory for readout_forward.1']
  %s0 = inlined_call_operand.vmem [shape: f32[256,1024], index: 0, kind: input, shape index: {}]
  %s1 = inlined_call_operand.vmem [shape: bf16[128,128], index: 1, kind: input, shape index: {}]
  %s2 = inlined_call_operand.vmem [shape: f32[2,128], index: 2, kind: input, shape index: {}]
  %s3 = inlined_call_operand.<no memory space> [shape: f32[1,1], index: 3, kind: input, shape index: {}]
  %s4 = inlined_call_operand.hbm [shape: f32[1,256], index: 4, kind: output, shape index: {}]
  %s5 = sld [smem:[#allocation0]]
  $region87: #{readout_forward.1} parent=0
    _
  %s7 = ssub.s32 1, %s5
  %s8 = scalar_select 0, %s7, %s5
  %9 = sst [smem:[#allocation2]] %s3
  $region1: #{readout_forward.1} parent=0
    #allocation3 [shape = 'u8[131072]{0}', space=vmem, size = 0x20000, scoped, tag = 'input window, operand 0']
    #allocation4 [shape = 'u8[1024]{0}', space=vmem, size = 0x400, scoped, tag = 'output window, operand 0']
    #allocation5 [shape = 's32[2]{0}', space=sflag, size = 0x8, scoped, tag = 'scoped memory for readout_forward.1']
    %10 = vsyncpa [#allocation5], 0
    %s11 = scalar_lea.sflag [#allocation5], 1
    %12 = vsyncpa %s11, 0
    loop: start=0, step=1, limit=4
    $region2: #{readout_forward.1} parent=1 // loop_pre_header
      _
    $region3: #{readout_forward.1} parent=1 // loop_header
      %s14 = sphi 0, %s18
      %p15 = scmp.ge.s32.totalorder %s14, 4
      %s24 = sphi 0, %s26
      %s27 = sphi 0, %s24
      %s28 = sphi 0, %s27
      %s44 = sphi 0, %s28
      %s48 = sphi 0, %s48
      %s50 = sphi 0, %s48
      %s51 = sphi 0, %s50
      %s65 = sphi 0, %s51
      %s69 = sphi 0, %s69
      %s71 = sphi 0, %s69
      %s72 = sphi 0, %s71
      %s86 = sphi 0, %s72
      %s90 = sphi 0, %s90
      %s92 = sphi 0, %s90
      %s93 = sphi 0, %s92
      %s107 = sphi 0, %s93
      %s113 = sphi 0, %s115
      %s116 = sphi 0, %s113
      %s117 = sphi 0, %s116
      %s133 = sphi 0, %s117
    $region4: #{readout_forward.1} parent=1 // loop_header_branch
      %17 = sbr.rel (%p15) target = $region8
    $region5: #{readout_forward.1} parent=1 // loop_body
      %s19 = ssub.s32 %s14, 1
      %s20 = ssub.s32 %s14, 2
      %s21 = sadd.s32 %s14, 1
      %s22 = ssub.s32 %s14, %s21
      %p23 = scmp.eq.s32.totalorder %s22, 0
      %s25 = sadd.s32 %s24, 1
      %s26 = scalar_select %p23, %s24, %s25
      %p29 = pneg %p23
      %p30 = scmp.eq.s32.totalorder %s14, 1
      %p31 = por %p29, %p30
      %p32 = scmp.ne.s32.totalorder %s24, %s27
      %p33 = scmp.eq.s32.totalorder %s14, 0
      %p34 = por %p32, %p33
      %p35 = scmp.ne.s32.totalorder %s24, %s27
      %p36 = scmp.eq.s32.totalorder %s19, 1
      %p37 = por %p35, %p36
      %p38 = scmp.ne.s32.totalorder %s27, %s28
      %p39 = scmp.eq.s32.totalorder %s19, 0
      %p40 = por %p38, %p39
      %p41 = scmp.ne.s32.totalorder %s27, %s28
      %p42 = scmp.eq.s32.totalorder %s20, 1
      %p43 = por %p41, %p42
      %p45 = scmp.ne.s32.totalorder %s28, %s44
      %p46 = scmp.eq.s32.totalorder %s20, 0
      %p47 = por %p45, %p46
      %s49 = sadd.s32 %s48, 1
      %p52 = scmp.eq.s32.totalorder %s14, 1
      %p53 = scmp.ne.s32.totalorder %s48, %s50
      %p54 = scmp.eq.s32.totalorder %s14, 0
      %p55 = por %p53, %p54
      %p56 = scmp.ne.s32.totalorder %s48, %s50
      %p57 = scmp.eq.s32.totalorder %s19, 1
      %p58 = por %p56, %p57
      %p59 = scmp.ne.s32.totalorder %s50, %s51
      %p60 = scmp.eq.s32.totalorder %s19, 0
      %p61 = por %p59, %p60
      %p62 = scmp.ne.s32.totalorder %s50, %s51
      %p63 = scmp.eq.s32.totalorder %s20, 1
      %p64 = por %p62, %p63
      %p66 = scmp.ne.s32.totalorder %s51, %s65
      %p67 = scmp.eq.s32.totalorder %s20, 0
      %p68 = por %p66, %p67
      %s70 = sadd.s32 %s69, 1
      %p73 = scmp.eq.s32.totalorder %s14, 1
      %p74 = scmp.ne.s32.totalorder %s69, %s71
      %p75 = scmp.eq.s32.totalorder %s14, 0
      %p76 = por %p74, %p75
      %p77 = scmp.ne.s32.totalorder %s69, %s71
      %p78 = scmp.eq.s32.totalorder %s19, 1
      %p79 = por %p77, %p78
      %p80 = scmp.ne.s32.totalorder %s71, %s72
      %p81 = scmp.eq.s32.totalorder %s19, 0
      %p82 = por %p80, %p81
      %p83 = scmp.ne.s32.totalorder %s71, %s72
      %p84 = scmp.eq.s32.totalorder %s20, 1
      %p85 = por %p83, %p84
      %p87 = scmp.ne.s32.totalorder %s72, %s86
      %p88 = scmp.eq.s32.totalorder %s20, 0
      %p89 = por %p87, %p88
      %s91 = sadd.s32 %s90, 1
      %p94 = scmp.eq.s32.totalorder %s14, 1
      %p95 = scmp.ne.s32.totalorder %s90, %s92
      %p96 = scmp.eq.s32.totalorder %s14, 0
      %p97 = por %p95, %p96
      %p98 = scmp.ne.s32.totalorder %s90, %s92
      %p99 = scmp.eq.s32.totalorder %s19, 1
      %p100 = por %p98, %p99
      %p101 = scmp.ne.s32.totalorder %s92, %s93
      %p102 = scmp.eq.s32.totalorder %s19, 0
      %p103 = por %p101, %p102
      %p104 = scmp.ne.s32.totalorder %s92, %s93
      %p105 = scmp.eq.s32.totalorder %s20, 1
      %p106 = por %p104, %p105
      %p108 = scmp.ne.s32.totalorder %s93, %s107
      %p109 = scmp.eq.s32.totalorder %s20, 0
      %p110 = por %p108, %p109
      %s111 = ssub.s32 %s14, %s21
      %p112 = scmp.eq.s32.totalorder %s111, 0
      %s114 = sadd.s32 %s113, 1
      %s115 = scalar_select %p112, %s113, %s114
      %p118 = pneg %p112
      %p119 = scmp.eq.s32.totalorder %s14, 1
      %p120 = por %p118, %p119
      %p121 = scmp.ne.s32.totalorder %s113, %s116
      %p122 = scmp.eq.s32.totalorder %s14, 0
      %p123 = por %p121, %p122
      %p124 = scmp.ne.s32.totalorder %s113, %s116
      %p125 = scmp.eq.s32.totalorder %s19, 1
      %p126 = por %p124, %p125
      %p127 = scmp.ne.s32.totalorder %s116, %s117
      %p128 = scmp.eq.s32.totalorder %s19, 0
      %p129 = por %p127, %p128
      %p130 = scmp.ne.s32.totalorder %s116, %s117
      %p131 = scmp.eq.s32.totalorder %s20, 1
      %p132 = por %p130, %p131
      %p134 = scmp.ne.s32.totalorder %s117, %s133
      %p135 = scmp.eq.s32.totalorder %s20, 0
      %p136 = por %p134, %p135
      %p137 = scmp.le.s32.totalorder 1, %s14
      %p138 = scmp.lt.s32.totalorder %s14, 3
      %p139 = pnand %p137, %p138
      %p140 = pneg %p139
      // Predicated region
      $region9: #{readout_forward.1} parent=5 // pred_check
        _
      $region10: #{readout_forward.1} parent=5 // pred_check_branch
        %142 = sbr.rel (%p139) target = $region12
      $region11: #{readout_forward.1} parent=5 // pred_region
        %s143 = ssub.s32 %s14, 1
        // Predicated region
        $region13: #{readout_forward.1} parent=11 // pred_check
          %p144 = pneg %p61
        $region14: #{readout_forward.1} parent=11 // pred_check_branch
          %146 = sbr.rel (%p144) target = $region16
        $region15: #{readout_forward.1} parent=11 // pred_region
          _
        $region16: #{readout_forward.1} parent=11 // pred_fallthru
          _
        // Predicated region
        $region17: #{readout_forward.1} parent=11 // pred_check
          %p147 = pneg %p82
        $region18: #{readout_forward.1} parent=11 // pred_check_branch
          %149 = sbr.rel (%p147) target = $region20
        $region19: #{readout_forward.1} parent=11 // pred_region
          _
        $region20: #{readout_forward.1} parent=11 // pred_fallthru
          _
        // Predicated region
        $region21: #{readout_forward.1} parent=11 // pred_check
          %p150 = pneg %p103
        $region22: #{readout_forward.1} parent=11 // pred_check_branch
          %152 = sbr.rel (%p150) target = $region24
        $region23: #{readout_forward.1} parent=11 // pred_region
          _
        $region24: #{readout_forward.1} parent=11 // pred_fallthru
          _
      $region12: #{readout_forward.1} parent=5 // pred_fallthru
        _
      %p153 = scmp.lt.s32.totalorder %s14, 2
      // Predicated region
      $region25: #{readout_forward.1} parent=5 // pred_check
        %p154 = pneg %p153
      $region26: #{readout_forward.1} parent=5 // pred_check_branch
        %156 = sbr.rel (%p154) target = $region28
      $region27: #{readout_forward.1} parent=5 // pred_region
        // Predicated region
        $region29: #{readout_forward.1} parent=27 // pred_check
          %p157 = pneg %p34
        $region30: #{readout_forward.1} parent=27 // pred_check_branch
          %159 = sbr.rel (%p157) target = $region32
        $region31: #{readout_forward.1} parent=27 // pred_region
          %s160 = sand.u32 %s24, 1
          %s161 = sand.u32 %s24, 1
          %s162 = smul.addr %s161, 128
          %s163 = scalar_lea.vmem [#allocation3], %s162
          %s164 = smul.u32 16, %s14
          %s165 = smul.addr %s164, 8
          %s166 = smul.addr %s165, 8
          %s167 = scalar_lea.vmem %s0, %s166
          // Predicated region
          $region33: #{readout_forward.1} parent=31 // pred_check
            _
          $region34: #{readout_forward.1} parent=31 // pred_check_branch
            %169 = sbr.rel (0) target = $region36
          $region35: #{readout_forward.1} parent=31 // pred_region
            // Predicated region
            $region37: #{readout_forward.1} parent=35 // pred_check
              _
            $region38: #{readout_forward.1} parent=35 // pred_check_branch
              %171 = sbr.rel (0) target = $region40
            $region39: #{readout_forward.1} parent=35 // pred_region
              // Predicated region
              $region52: #{readout_forward.1} parent=39 // pred_check
                _
              $region53: #{readout_forward.1} parent=39 // pred_check_branch
                %217 = sbr.rel (0) target = $region55
              $region54: #{readout_forward.1} parent=39 // pred_region
                loop: start=0, step=1, limit=1
                $region56: #{readout_forward.1} parent=54 // loop_pre_header
                  _
                $region57: #{readout_forward.1} parent=54 // loop_header
                  %s219 = sphi 0, %s223
                  %p220 = scmp.ge.s32.totalorder %s219, 1
                  %s224 = sphi %s167, %s167
                  %s225 = sphi %s163, %s163
                $region58: #{readout_forward.1} parent=54 // loop_header_branch
                  %222 = sbr.rel (%p220) target = $region62
                $region59: #{readout_forward.1} parent=54 // loop_body
                  %v226 = vld [vmem:[%s224] sm:$0xff]
                  %227 = vst [vmem:[%s225] sm:$0xff] %v226
                  %v228 = vld [vmem:[%s224 + $0x40] sm:$0xff]
                  %229 = vst [vmem:[%s225 + $0x8] sm:$0xff] %v228
                  %v230 = vld [vmem:[%s224 + $0x80] sm:$0xff]
                  %231 = vst [vmem:[%s225 + $0x10] sm:$0xff] %v230
                  %v232 = vld [vmem:[%s224 + $0xc0] sm:$0xff]
                  %233 = vst [vmem:[%s225 + $0x18] sm:$0xff] %v232
                  %v234 = vld [vmem:[%s224 + $0x100] sm:$0xff]
                  %235 = vst [vmem:[%s225 + $0x20] sm:$0xff] %v234
                  %v236 = vld [vmem:[%s224 + $0x140] sm:$0xff]
                  %237 = vst [vmem:[%s225 + $0x28] sm:$0xff] %v236
                  %v238 = vld [vmem:[%s224 + $0x180] sm:$0xff]
                  %239 = vst [vmem:[%s225 + $0x30] sm:$0xff] %v238
                  %v240 = vld [vmem:[%s224 + $0x1c0] sm:$0xff]
                  %241 = vst [vmem:[%s225 + $0x38] sm:$0xff] %v240
                  %v242 = vld [vmem:[%s224 + $0x200] sm:$0xff]
                  %243 = vst [vmem:[%s225 + $0x40] sm:$0xff] %v242
                  %v244 = vld [vmem:[%s224 + $0x240] sm:$0xff]
                  %245 = vst [vmem:[%s225 + $0x48] sm:$0xff] %v244
                  %v246 = vld [vmem:[%s224 + $0x280] sm:$0xff]
                  %247 = vst [vmem:[%s225 + $0x50] sm:$0xff] %v246
                  %v248 = vld [vmem:[%s224 + $0x2c0] sm:$0xff]
                  %249 = vst [vmem:[%s225 + $0x58] sm:$0xff] %v248
                  %v250 = vld [vmem:[%s224 + $0x300] sm:$0xff]
                  %251 = vst [vmem:[%s225 + $0x60] sm:$0xff] %v250
                  %v252 = vld [vmem:[%s224 + $0x340] sm:$0xff]
                  %253 = vst [vmem:[%s225 + $0x68] sm:$0xff] %v252
                  %v254 = vld [vmem:[%s224 + $0x380] sm:$0xff]
                  %255 = vst [vmem:[%s225 + $0x70] sm:$0xff] %v254
                  %v256 = vld [vmem:[%s224 + $0x3c0] sm:$0xff]
                  %257 = vst [vmem:[%s225 + $0x78] sm:$0xff] %v256
                $region60: #{readout_forward.1} parent=54 // loop_footer
                  %s223 = sadd.s32 1, %s219
                $region61: #{readout_forward.1} parent=54 // loop_footer_branch
                  %218 = sbr.rel target = $region57
                $region62: #{readout_forward.1} parent=54 // loop_exit
                  _
              $region55: #{readout_forward.1} parent=39 // pred_fallthru
                _
              // Predicated region
              $region63: #{readout_forward.1} parent=39 // pred_check
                _
              $region64: #{readout_forward.1} parent=39 // pred_check_branch
                %259 = sbr.rel target = $region66
              $region65: #{readout_forward.1} parent=39 // pred_region
                _
              $region66: #{readout_forward.1} parent=39 // pred_fallthru
                _
            $region40: #{readout_forward.1} parent=35 // pred_fallthru
              _
            // Predicated region
            $region41: #{readout_forward.1} parent=35 // pred_check
              _
            $region42: #{readout_forward.1} parent=35 // pred_check_branch
              %173 = sbr.rel target = $region44
            $region43: #{readout_forward.1} parent=35 // pred_region
              %s175 = ssub.s32 256, 1
              loop: start=0, step=1, limit=1
              $region45: #{readout_forward.1} parent=43 // loop_pre_header
                _
              $region46: #{readout_forward.1} parent=43 // loop_header
                %s177 = sphi 0, %s181
                %p178 = scmp.ge.s32.totalorder %s177, 1
                %s182 = sphi %s167, %s167
                %s183 = sphi %s163, %s163
              $region47: #{readout_forward.1} parent=43 // loop_header_branch
                %180 = sbr.rel (%p178) target = $region51
              $region48: #{readout_forward.1} parent=43 // loop_body
                %v184 = vld [vmem:[%s182] sm:%s175]
                %185 = vst [vmem:[%s183] sm:%s175] %v184
                %v186 = vld [vmem:[%s182 + $0x40] sm:%s175]
                %187 = vst [vmem:[%s183 + $0x8] sm:%s175] %v186
                %v188 = vld [vmem:[%s182 + $0x80] sm:%s175]
                %189 = vst [vmem:[%s183 + $0x10] sm:%s175] %v188
                %v190 = vld [vmem:[%s182 + $0xc0] sm:%s175]
                %191 = vst [vmem:[%s183 + $0x18] sm:%s175] %v190
                %v192 = vld [vmem:[%s182 + $0x100] sm:%s175]
                %193 = vst [vmem:[%s183 + $0x20] sm:%s175] %v192
                %v194 = vld [vmem:[%s182 + $0x140] sm:%s175]
                %195 = vst [vmem:[%s183 + $0x28] sm:%s175] %v194
                %v196 = vld [vmem:[%s182 + $0x180] sm:%s175]
                %197 = vst [vmem:[%s183 + $0x30] sm:%s175] %v196
                %v198 = vld [vmem:[%s182 + $0x1c0] sm:%s175]
                %199 = vst [vmem:[%s183 + $0x38] sm:%s175] %v198
                %v200 = vld [vmem:[%s182 + $0x200] sm:%s175]
                %201 = vst [vmem:[%s183 + $0x40] sm:%s175] %v200
                %v202 = vld [vmem:[%s182 + $0x240] sm:%s175]
                %203 = vst [vmem:[%s183 + $0x48] sm:%s175] %v202
                %v204 = vld [vmem:[%s182 + $0x280] sm:%s175]
                %205 = vst [vmem:[%s183 + $0x50] sm:%s175] %v204
                %v206 = vld [vmem:[%s182 + $0x2c0] sm:%s175]
                %207 = vst [vmem:[%s183 + $0x58] sm:%s175] %v206
                %v208 = vld [vmem:[%s182 + $0x300] sm:%s175]
                %209 = vst [vmem:[%s183 + $0x60] sm:%s175] %v208
                %v210 = vld [vmem:[%s182 + $0x340] sm:%s175]
                %211 = vst [vmem:[%s183 + $0x68] sm:%s175] %v210
                %v212 = vld [vmem:[%s182 + $0x380] sm:%s175]
                %213 = vst [vmem:[%s183 + $0x70] sm:%s175] %v212
                %v214 = vld [vmem:[%s182 + $0x3c0] sm:%s175]
                %215 = vst [vmem:[%s183 + $0x78] sm:%s175] %v214
              $region49: #{readout_forward.1} parent=43 // loop_footer
                %s181 = sadd.s32 1, %s177
              $region50: #{readout_forward.1} parent=43 // loop_footer_branch
                %176 = sbr.rel target = $region46
              $region51: #{readout_forward.1} parent=43 // loop_exit
                _
            $region44: #{readout_forward.1} parent=35 // pred_fallthru
              _
          $region36: #{readout_forward.1} parent=31 // pred_fallthru
            _
          %260 = vnop
        $region32: #{readout_forward.1} parent=27 // pred_fallthru
          _
      $region28: #{readout_forward.1} parent=5 // pred_fallthru
        _
      %p261 = scmp.le.s32.totalorder 1, %s14
      %p262 = scmp.lt.s32.totalorder %s14, 3
      %p263 = pnand %p261, %p262
      %p264 = pneg %p263
      // Predicated region
      $region67: #{readout_forward.1} parent=5 // pred_check
        _
      $region68: #{readout_forward.1} parent=5 // pred_check_branch
        %266 = sbr.rel (%p263) target = $region70
      $region69: #{readout_forward.1} parent=5 // pred_region
        %s267 = ssub.s32 %s14, 1
        %s268 = sand.u32 %s27, 1
        %s269 = sand.u32 %s27, 1
        %s270 = smul.addr %s269, 128
        %s271 = scalar_lea.vmem [#allocation3], %s270
        // Predicated region
        $region71: #{readout_forward.1} parent=69 // pred_check
          %p272 = pneg %p40
        $region72: #{readout_forward.1} parent=69 // pred_check_branch
          %274 = sbr.rel (%p272) target = $region74
        $region73: #{readout_forward.1} parent=69 // pred_region
          _
        $region74: #{readout_forward.1} parent=69 // pred_fallthru
          _
        %s275 = sand.u32 %s27, 1
        %s276 = sand.u32 %s27, 1
        %s277 = smul.addr %s276, 128
        %s278 = scalar_lea.vmem [#allocation3], %s277
        %p279 = pneg %p40
        %p280 = pneg %p37
        %p281 = pneg %p61
        %p282 = pneg %p58
        %p283 = pneg %p82
        %p284 = pneg %p79
        %p285 = pneg %p103
        %p286 = pneg %p100
        %p287 = pneg %p129
        %p288 = pneg %p126
        %s289 = sand.u32 %s116, 1
        %s290 = scalar_lea.sflag [#allocation5], %s289
        %s291 = sand.u32 %s116, 1
        %s292 = scalar_lea.vmem [#allocation4], %s291
        %s293 = smul.u32 16, %s19
        %v295 = vld [vmem:[%s271] sm:$0xff]
        %v296 = vld [vmem:[%s271 + $0x8] sm:$0xff]
        %v297 = vld [vmem:[%s271 + $0x10] sm:$0xff]
        %v298 = vld [vmem:[%s271 + $0x18] sm:$0xff]
        %v299 = vld [vmem:[%s271 + $0x20] sm:$0xff]
        %v300 = vld [vmem:[%s271 + $0x28] sm:$0xff]
        %v301 = vld [vmem:[%s271 + $0x30] sm:$0xff]
        %v302 = vld [vmem:[%s271 + $0x38] sm:$0xff]
        %v303 = vld [vmem:[%s271 + $0x40] sm:$0xff]
        %v304 = vld [vmem:[%s271 + $0x48] sm:$0xff]
        %v305 = vld [vmem:[%s271 + $0x50] sm:$0xff]
        %v306 = vld [vmem:[%s271 + $0x58] sm:$0xff]
        %v307 = vld [vmem:[%s271 + $0x60] sm:$0xff]
        %v308 = vld [vmem:[%s271 + $0x68] sm:$0xff]
        %v309 = vld [vmem:[%s271 + $0x70] sm:$0xff]
        %v310 = vld [vmem:[%s271 + $0x78] sm:$0xff]
        %v311 = vpack.c.bf16 %v296, %v295
        %v312 = vpack.c.bf16 %v298, %v297
        %v313 = vpack.c.bf16 %v300, %v299
        %v314 = vpack.c.bf16 %v302, %v301
        %v315 = vpack.c.bf16 %v304, %v303
        %v316 = vpack.c.bf16 %v306, %v305
        %v317 = vpack.c.bf16 %v308, %v307
        %v318 = vpack.c.bf16 %v310, %v309
        %v319 = vld [vmem:[%s1] sm:$0xf]
        %v320 = vld [vmem:[%s1 + $0x4] sm:$0xf]
        %v321 = vld [vmem:[%s1 + $0x8] sm:$0xf]
        %v322 = vld [vmem:[%s1 + $0xc] sm:$0xf]
        %v323 = vld [vmem:[%s1 + $0x10] sm:$0xf]
        %v324 = vld [vmem:[%s1 + $0x14] sm:$0xf]
        %v325 = vld [vmem:[%s1 + $0x18] sm:$0xf]
        %v326 = vld [vmem:[%s1 + $0x1c] sm:$0xf]
        %v327 = vld [vmem:[%s1 + $0x20] sm:$0xf]
        %v328 = vld [vmem:[%s1 + $0x24] sm:$0xf]
        %v329 = vld [vmem:[%s1 + $0x28] sm:$0xf]
        %v330 = vld [vmem:[%s1 + $0x2c] sm:$0xf]
        %v331 = vld [vmem:[%s1 + $0x30] sm:$0xf]
        %v332 = vld [vmem:[%s1 + $0x34] sm:$0xf]
        %v333 = vld [vmem:[%s1 + $0x38] sm:$0xf]
        %v334 = vld [vmem:[%s1 + $0x3c] sm:$0xf]
        %v335 = vld [vmem:[%s2] sm:$0x1]
        %v336 = vlaneseq
        %v337 = vshrl.u32 %v336, 7
        %v338 = vsub.s32 0, %v337
        %v339 = vrot.slane %v335, %v338
        %v356 = vunpack.c.l.b16 %v319
        %v357 = vunpack.c.l.b16 %v320
        %v358 = vunpack.c.l.b16 %v321
        %v359 = vunpack.c.l.b16 %v322
        %v360 = vunpack.c.l.b16 %v323
        %v361 = vunpack.c.l.b16 %v324
        %v362 = vunpack.c.l.b16 %v325
        %v363 = vunpack.c.l.b16 %v326
        %v364 = vunpack.c.l.b16 %v327
        %v365 = vunpack.c.l.b16 %v328
        %v366 = vunpack.c.l.b16 %v329
        %v367 = vunpack.c.l.b16 %v330
        %v368 = vunpack.c.l.b16 %v331
        %v369 = vunpack.c.l.b16 %v332
        %v370 = vunpack.c.l.b16 %v333
        %v371 = vunpack.c.l.b16 %v334
        %v372 = vpack.c.b16 %v357, %v356
        %v373 = vpack.c.b16 %v359, %v358
        %v374 = vpack.c.b16 %v361, %v360
        %v375 = vpack.c.b16 %v363, %v362
        %v376 = vpack.c.b16 %v365, %v364
        %v377 = vpack.c.b16 %v367, %v366
        %v378 = vpack.c.b16 %v369, %v368
        %v379 = vpack.c.b16 %v371, %v370
        %388 = vmatprep.subr.bf16.mxu0 0
        %389 = vmatpush1.bf16.msra.mxu0 %v379
        %390 = vmatprep.subr.bf16.mxu0 0
        %391 = vmatpush1.bf16.msra.mxu0 %v378
        %392 = vmatprep.subr.bf16.mxu0 0
        %393 = vmatpush1.bf16.msra.mxu0 %v377
        %394 = vmatprep.subr.bf16.mxu0 0
        %395 = vmatpush1.bf16.msra.mxu0 %v376
        %396 = vmatprep.subr.bf16.mxu0 0
        %397 = vmatpush1.bf16.msra.mxu0 %v375
        %398 = vmatprep.subr.bf16.mxu0 0
        %399 = vmatpush1.bf16.msra.mxu0 %v374
        %400 = vmatprep.subr.bf16.mxu0 0
        %401 = vmatpush1.bf16.msra.mxu0 %v373
        %402 = vmatprep.subr.bf16.mxu0 0
        %403 = vmatpush1.bf16.msra.mxu0 %v372
        %404 = vmatprep.subr.bf16.mxu0 0
        %405 = vmatpush2.bf16.msra.mxu0 0
        %406 = vmatprep.subr.bf16.mxu0 0
        %407 = vmatpush2.bf16.msra.mxu0 0
        %408 = vmatprep.subr.bf16.mxu0 0
        %409 = vmatpush2.bf16.msra.mxu0 0
        %410 = vmatprep.subr.bf16.mxu0 0
        %411 = vmatpush2.bf16.msra.mxu0 0
        %412 = vmatprep.subr.bf16.mxu0 0
        %413 = vmatpush2.bf16.msra.mxu0 0
        %414 = vmatprep.subr.bf16.mxu0 0
        %415 = vmatpush2.bf16.msra.mxu0 0
        %416 = vmatprep.subr.bf16.mxu0 0
        %417 = vmatpush2.bf16.msra.mxu0 0
        %418 = vmatprep.subr.bf16.mxu0 0
        %419 = vmatpush2.bf16.msra.mxu0 0
        %420 = vmatprep.mubr.bf16.mxu0 0
        %421 = vmatmul.mubr.bf16.gmra.mxu0 %v311
        %v422 = vpop.f32.mrf.mxu0
        %v423 = vadd.f32 %v339, %v422
        %v424 = vpop.f32.mrf.mxu0
        %v425 = vpop.f32.mrf.mxu0
        %v426 = vadd.f32 %v339, %v425
        %v427 = vpop.f32.mrf.mxu0
        %428 = vmatprep.mubr.bf16.mxu0 0
        %429 = vmatmul.mubr.bf16.gmra.mxu0 %v312
        %v430 = vpop.f32.mrf.mxu0
        %v431 = vadd.f32 %v339, %v430
        %v432 = vpop.f32.mrf.mxu0
        %v433 = vpop.f32.mrf.mxu0
        %v434 = vadd.f32 %v339, %v433
        %v435 = vpop.f32.mrf.mxu0
        %436 = vmatprep.mubr.bf16.mxu0 0
        %437 = vmatmul.mubr.bf16.gmra.mxu0 %v313
        %v438 = vpop.f32.mrf.mxu0
        %v439 = vadd.f32 %v339, %v438
        %v440 = vpop.f32.mrf.mxu0
        %v441 = vpop.f32.mrf.mxu0
        %v442 = vadd.f32 %v339, %v441
        %v443 = vpop.f32.mrf.mxu0
        %444 = vmatprep.mubr.bf16.mxu0 0
        %445 = vmatmul.mubr.bf16.gmra.mxu0 %v314
        %v446 = vpop.f32.mrf.mxu0
        %v447 = vadd.f32 %v339, %v446
        %v448 = vpop.f32.mrf.mxu0
        %v449 = vpop.f32.mrf.mxu0
        %v450 = vadd.f32 %v339, %v449
        %v451 = vpop.f32.mrf.mxu0
        %452 = vmatprep.mubr.bf16.mxu0 0
        %453 = vmatmul.mubr.bf16.gmra.mxu0 %v315
        %v454 = vpop.f32.mrf.mxu0
        %v455 = vadd.f32 %v339, %v454
        %v456 = vpop.f32.mrf.mxu0
        %v457 = vpop.f32.mrf.mxu0
        %v458 = vadd.f32 %v339, %v457
        %v459 = vpop.f32.mrf.mxu0
        %460 = vmatprep.mubr.bf16.mxu0 0
        %461 = vmatmul.mubr.bf16.gmra.mxu0 %v316
        %v462 = vpop.f32.mrf.mxu0
        %v463 = vadd.f32 %v339, %v462
        %v464 = vpop.f32.mrf.mxu0
        %v465 = vpop.f32.mrf.mxu0
        %v466 = vadd.f32 %v339, %v465
        %v467 = vpop.f32.mrf.mxu0
        %468 = vmatprep.mubr.bf16.mxu0 0
        %469 = vmatmul.mubr.bf16.gmra.mxu0 %v317
        %v470 = vpop.f32.mrf.mxu0
        %v471 = vadd.f32 %v339, %v470
        %v472 = vpop.f32.mrf.mxu0
        %v473 = vpop.f32.mrf.mxu0
        %v474 = vadd.f32 %v339, %v473
        %v475 = vpop.f32.mrf.mxu0
        %476 = vmatprep.mubr.bf16.mxu0 0
        %477 = vmatmul.mubr.bf16.gmra.mxu0 %v318
        %v478 = vpop.f32.mrf.mxu0
        %v479 = vadd.f32 %v339, %v478
        %v480 = vpop.f32.mrf.mxu0
        %v481 = vpop.f32.mrf.mxu0
        %v482 = vadd.f32 %v339, %v481
        %v483 = vpop.f32.mrf.mxu0
        %484 = vdwg.mxu0
        %v485 = vmax.f32 %v423, 0.0
        %v486 = vmax.f32 %v426, 0.0
        %v487 = vmax.f32 %v431, 0.0
        %v488 = vmax.f32 %v434, 0.0
        %v489 = vmax.f32 %v439, 0.0
        %v490 = vmax.f32 %v442, 0.0
        %v491 = vmax.f32 %v447, 0.0
        %v492 = vmax.f32 %v450, 0.0
        %v493 = vmax.f32 %v455, 0.0
        %v494 = vmax.f32 %v458, 0.0
        %v495 = vmax.f32 %v463, 0.0
        %v496 = vmax.f32 %v466, 0.0
        %v497 = vmax.f32 %v471, 0.0
        %v498 = vmax.f32 %v474, 0.0
        %v499 = vmax.f32 %v479, 0.0
        %v500 = vmax.f32 %v482, 0.0
        %v501 = vld [vmem:[%s2 + $0x1] sm:$0x1]
        %s502 = sld [smem:[#allocation2]]
        %v503 = vstv %s502
        %504 = vmatprep.subr.mxu0 0.0
        %505 = vmatpush1.xpose.msra.mxu0 %v500
        %506 = vmatprep.subr.mxu0 0.0
        %507 = vmatpush1.xpose.msra.mxu0 %v499
        %508 = vmatprep.subr.mxu0 0.0
        %509 = vmatpush1.xpose.msra.mxu0 %v498
        %510 = vmatprep.subr.mxu0 0.0
        %511 = vmatpush1.xpose.msra.mxu0 %v497
        %512 = vmatprep.subr.mxu0 0.0
        %513 = vmatpush1.xpose.msra.mxu0 %v496
        %514 = vmatprep.subr.mxu0 0.0
        %515 = vmatpush1.xpose.msra.mxu0 %v495
        %516 = vmatprep.subr.mxu0 0.0
        %517 = vmatpush1.xpose.msra.mxu0 %v494
        %518 = vmatprep.subr.mxu0 0.0
        %519 = vmatpush1.xpose.msra.mxu0 %v493
        %520 = vmatprep.subr.mxu0 0.0
        %521 = vmatpush1.xpose.msra.mxu0 %v492
        %522 = vmatprep.subr.mxu0 0.0
        %523 = vmatpush1.xpose.msra.mxu0 %v491
        %524 = vmatprep.subr.mxu0 0.0
        %525 = vmatpush1.xpose.msra.mxu0 %v490
        %526 = vmatprep.subr.mxu0 0.0
        %527 = vmatpush1.xpose.msra.mxu0 %v489
        %528 = vmatprep.subr.mxu0 0.0
        %529 = vmatpush1.xpose.msra.mxu0 %v488
        %530 = vmatprep.subr.mxu0 0.0
        %531 = vmatpush1.xpose.msra.mxu0 %v487
        %532 = vmatprep.subr.mxu0 0.0
        %533 = vmatpush1.xpose.msra.mxu0 %v486
        %534 = vmatprep.subr.mxu0 0.0
        %535 = vmatpush1.xpose.msra.mxu0 %v485
        %536 = vmatprep.subr.mxu0 0.0
        %537 = vmatpush2.xpose.msra.mxu0 0.0
        %538 = vmatprep.subr.mxu0 0.0
        %539 = vmatpush2.xpose.msra.mxu0 0.0
        %540 = vmatprep.subr.mxu0 0.0
        %541 = vmatpush2.xpose.msra.mxu0 0.0
        %542 = vmatprep.subr.mxu0 0.0
        %543 = vmatpush2.xpose.msra.mxu0 0.0
        %544 = vmatprep.subr.mxu0 0.0
        %545 = vmatpush2.xpose.msra.mxu0 0.0
        %546 = vmatprep.subr.mxu0 0.0
        %547 = vmatpush2.xpose.msra.mxu0 0.0
        %548 = vmatprep.subr.mxu0 0.0
        %549 = vmatpush2.xpose.msra.mxu0 0.0
        %550 = vmatprep.subr.mxu0 0.0
        %551 = vmatpush2.xpose.msra.mxu0 0.0
        %552 = vmatprep.subr.mxu0 0.0
        %553 = vmatpush2.xpose.msra.mxu0 0.0
        %554 = vmatprep.subr.mxu0 0.0
        %555 = vmatpush2.xpose.msra.mxu0 0.0
        %556 = vmatprep.subr.mxu0 0.0
        %557 = vmatpush2.xpose.msra.mxu0 0.0
        %558 = vmatprep.subr.mxu0 0.0
        %559 = vmatpush2.xpose.msra.mxu0 0.0
        %560 = vmatprep.subr.mxu0 0.0
        %561 = vmatpush2.xpose.msra.mxu0 0.0
        %562 = vmatprep.subr.mxu0 0.0
        %563 = vmatpush2.xpose.msra.mxu0 0.0
        %564 = vmatprep.subr.mxu0 0.0
        %565 = vmatpush2.xpose.msra.mxu0 0.0
        %566 = vmatprep.subr.mxu0 0.0
        %567 = vmatpush2.xpose.msra.mxu0 0.0
        %568 = vmatprep.mubr.f32.mxu0 0.0
        %569 = vmatmul.mubr.f32.gmra.mxu0 %v501
        %v570 = vpop.f32.mrf.mxu0
        %v571 = vadd.f32 %v503, %v570
        %v572 = vpop.f32.mrf.mxu0
        %573 = vdwg.mxu0
        %574 = vst [vmem:[%s292] sm:$0x1] %v571
        %s575 = sand.u32 %s116, 1
        %s576 = scalar_lea.sflag [#allocation5], %s575
        %s577 = sand.u32 %s116, 1
        %s578 = scalar_lea.vmem [#allocation4], %s577
        // Predicated region
        $region75: #{readout_forward.1} parent=69 // pred_check
          %p579 = pneg %p126
        $region76: #{readout_forward.1} parent=69 // pred_check_branch
          %581 = sbr.rel (%p579) target = $region78
        $region77: #{readout_forward.1} parent=69 // pred_region
          %s583 = ssub.s32 16, 16
          %584 = vsyncadd %s576, %s583
          %s585 = smul.addr %s19, 16
          %s586 = scalar_lea.hbm %s4, %s585
          %s588 = sshll.u32 %s578, 4
          %s589 = int_to_ptr.vmem [resolvable:$true] %s588
          %591 = dma.vmem_to_hbm [thread:$0]  %s589, 16, %s586, %s576
        $region78: #{readout_forward.1} parent=69 // pred_fallthru
          _
      $region70: #{readout_forward.1} parent=5 // pred_fallthru
        _
      %p592 = scmp.le.s32.totalorder 2, %s14
      // Predicated region
      $region79: #{readout_forward.1} parent=5 // pred_check
        %p593 = pneg %p592
      $region80: #{readout_forward.1} parent=5 // pred_check_branch
        %595 = sbr.rel (%p593) target = $region82
      $region81: #{readout_forward.1} parent=5 // pred_region
        %s596 = ssub.s32 %s14, 2
        // Predicated region
        $region83: #{readout_forward.1} parent=81 // pred_check
          %p597 = pneg %p132
        $region84: #{readout_forward.1} parent=81 // pred_check_branch
          %599 = sbr.rel (%p597) target = $region86
        $region85: #{readout_forward.1} parent=81 // pred_region
          %s600 = sand.u32 %s117, 1
          %s601 = scalar_lea.sflag [#allocation5], %s600
          %s602 = sand.u32 %s117, 1
          %s603 = scalar_lea.vmem [#allocation4], %s602
          %604 = dma.done %s601, 16
        $region86: #{readout_forward.1} parent=81 // pred_fallthru
          _
      $region82: #{readout_forward.1} parent=5 // pred_fallthru
        _
    $region6: #{readout_forward.1} parent=1 // loop_footer
      %s18 = sadd.s32 1, %s14
    $region7: #{readout_forward.1} parent=1 // loop_footer_branch
      %13 = sbr.rel target = $region3
    $region8: #{readout_forward.1} parent=1 // loop_exit
      _
    %605 = vsyncpa [#allocation5], 1
    %s606 = scalar_lea.sflag [#allocation5], 1
    %607 = vsyncpa %s606, 1

</llo_original>
